<compile_context>
chip_gen: v6e
topology: v6e:2x2x1
jax: 0.10.0
libtpu: 0.0.40
codegen_flags: <defaults>
</compile_context>

<pallas_src>
from functools import partial

import jax
import jax.numpy as jnp
from jax.experimental import pallas as pl
from jax.experimental.pallas import tpu as pltpu


def _cdiv(a: int, b: int) -> int:
    return -(-a // b)


def _round_up(a: int, b: int) -> int:
    return _cdiv(a, b) * b


def _sublane_multiple(dtype) -> int:
    """Dtype-packed sublane multiple: 8 (f32), 16 (bf16), 32 (int8/fp8)."""
    return max(8, 32 // jnp.dtype(dtype).itemsize)


def _causal_pad_kernel(x_ref, o_ref, *, left, right, composed):
    """2-D refs: x_ref (TR, L), o_ref (TR, L + left + right)."""
    rows = o_ref.shape[0]
    length = x_ref.shape[1]
    if composed:
        # Compose zeros|x|zeros in registers, store the whole tile in one pass.
        parts = []
        if left > 0:
            parts.append(jnp.zeros((rows, left), dtype=o_ref.dtype))
        parts.append(x_ref[...])
        if right > 0:
            parts.append(jnp.zeros((rows, right), dtype=o_ref.dtype))
        o_ref[...] = parts[0] if len(parts) == 1 else jnp.concatenate(parts, axis=-1)
    else:
        # Proven 3-store fallback: shifted interior + pad-column zeros.
        o_ref[:, left:left + length] = x_ref[...]
        if left > 0:
            o_ref[:, :left] = jnp.zeros((rows, left), dtype=o_ref.dtype)
        if right > 0:
            o_ref[:, left + length:] = jnp.zeros((rows, right), dtype=o_ref.dtype)


def _vmem_budget_and_limit() -> tuple[int, int]:
    """(block budget for 2x(in+out) buffers, explicit vmem_limit_bytes).

    Generation-aware: v7x has only 64 MiB physical VMEM; v5e/v6e have 128 MiB.
    Unknown hardware is treated conservatively (v7x-class)."""
    phys = None
    try:
        phys = getattr(pltpu.get_tpu_info(), "vmem_capacity_bytes", None)
    except Exception:
        phys = None
    if phys is None or phys <= (80 << 20):
        return 24 << 20, 48 << 20      # v7x-class (or unknown): stay well under 64 MiB
    return 48 << 20, 96 << 20          # v5e/v6e: 128 MiB parts, push tiles larger


def _choose_row_tile(num_rows: int, l_in: int, l_out: int, itemsize: int,
                     budget_bytes: int, sublane_mult: int) -> int:
    """Row tile (multiple of the dtype sublane pack, or full extent).

    Returns 0 if even the minimal tile exceeds the VMEM budget (caller should
    fall back to jnp.pad)."""
    per_row = 2 * (l_in + l_out) * itemsize        # double-buffered in + out blocks
    tr = budget_bytes // max(per_row, 1)
    tr = (tr // sublane_mult) * sublane_mult
    if tr < sublane_mult:
        return 0
    if tr >= num_rows:
        if num_rows >= 2 * sublane_mult:
            # Guarantee >= 2 grid steps so both v7x TensorCores get work.
            tr = _round_up(_cdiv(num_rows, 2), sublane_mult)
        else:
            tr = num_rows                          # full extent is always legal
    return tr


def causal_pad(x: jax.Array, pad_size: int, lookahead: int = 0,
               *, row_tile: int | None = None,
               use_pallas: bool | None = None) -> jax.Array:
    """Equivalent of PyTorch CausalPad.forward for x of shape (B, C, L)."""
    left = pad_size - lookahead
    right = lookahead
    B, C, L = x.shape

    if left == 0 and right == 0:
        return x
    if left < 0 or right < 0:
        # Negative pad in PyTorch F.pad crops; tiny jnp fallback keeps semantics.
        lo = max(0, -left)
        hi = L - max(0, -right)
        return jnp.pad(x[..., lo:hi],
                       ((0, 0), (0, 0), (max(0, left), max(0, right))))

    L_out = L + left + right
    itemsize = jnp.dtype(x.dtype).itemsize

    # Small-input bypass: pallas_call launch + pipeline prologue costs several
    # microseconds; XLA's fused pad wins comfortably below ~0.5 MiB.
    if use_pallas is None:
        use_pallas = (x.size * itemsize) >= (512 * 1024)

    budget, vmem_limit = _vmem_budget_and_limit()
    mult = _sublane_multiple(x.dtype)
    R = B * C
    tr = row_tile if row_tile is not None else _choose_row_tile(
        R, L, L_out, itemsize, budget, mult)

    if (not use_pallas) or tr == 0:
        # TODO(synk): time-tiled grid axis for the huge-L / few-rows regime.
        return jnp.pad(x, ((0, 0), (0, 0), (left, right)))

    x2 = x.reshape(R, L)     # contiguous NCL -> free collapse onto sublanes
    grid = (pl.cdiv(R, tr),)
    cost = pl.CostEstimate(flops=0, transcendentals=0,
                           bytes_accessed=R * (L + L_out) * itemsize)

    def build(composed: bool):
        return pl.pallas_call(
            partial(_causal_pad_kernel, left=left, right=right, composed=composed),
            out_shape=jax.ShapeDtypeStruct((R, L_out), x.dtype),
            grid=grid,
            in_specs=[pl.BlockSpec((tr, L), lambda i: (i, 0))],
            out_specs=pl.BlockSpec((tr, L_out), lambda i: (i, 0)),
            compiler_params=pltpu.CompilerParams(
                dimension_semantics=("parallel",),   # rows independent -> megacore
                vmem_limit_bytes=vmem_limit,
            ),
            cost_estimate=cost,
        )

    try:
        out2 = build(True)(x2)       # composed single-store kernel (preferred)
    except Exception:
        out2 = build(False)(x2)      # proven separate-store kernel
    return out2.reshape(B, C, L_out)


if __name__ == "__main__":
    key = jax.random.PRNGKey(0)

    # --- 1) Small shape consistent with the module: batch=2, channels=4, seq=16.
    B, C, L = 2, 4, 16
    pad_size, lookahead = 3, 1
    x = jax.random.normal(key, (B, C, L), dtype=jnp.float32)
    out = jax.block_until_ready(causal_pad(x, pad_size, lookahead, use_pallas=True))
    ref = jnp.pad(x, ((0, 0), (0, 0), (pad_size - lookahead, lookahead)))
    assert out.shape == (B, C, L + pad_size) and out.dtype == x.dtype
    assert jnp.array_equal(out, ref), "mismatch (small f32 case)"

    # --- 2) Multi-block row grid (grid=(2,)), f32.
    B2, C2, L2 = 2, 8, 256
    pad2, la2 = 4, 2
    x2 = jax.random.normal(jax.random.PRNGKey(1), (B2, C2, L2), dtype=jnp.float32)
    out2 = jax.block_until_ready(causal_pad(x2, pad2, la2, row_tile=8, use_pallas=True))
    ref2 = jnp.pad(x2, ((0, 0), (0, 0), (pad2 - la2, la2)))
    assert jnp.array_equal(out2, ref2), "mismatch (tiled f32 case)"

    # --- 3) bf16: packed sublane multiple (16) + auto >=2-step grid, right=0.
    B3, C3, L3 = 2, 16, 64
    pad3, la3 = 5, 0
    x3 = jax.random.normal(jax.random.PRNGKey(2), (B3, C3, L3)).astype(jnp.bfloat16)
    out3 = jax.block_until_ready(causal_pad(x3, pad3, la3, use_pallas=True))
    ref3 = jnp.pad(x3, ((0, 0), (0, 0), (pad3 - la3, la3)))
    assert out3.dtype == jnp.bfloat16
    assert jnp.array_equal(out3, ref3), "mismatch (bf16 case)"

    # --- 4) Partial last row block (R=10, tile=8) and left=0 (pure lookahead pad).
    B4, C4, L4 = 2, 5, 32
    pad4, la4 = 2, 2
    x4 = jax.random.normal(jax.random.PRNGKey(3), (B4, C4, L4), dtype=jnp.float32)
    out4 = jax.block_until_ready(causal_pad(x4, pad4, la4, row_tile=8, use_pallas=True))
    ref4 = jnp.pad(x4, ((0, 0), (0, 0), (pad4 - la4, la4)))
    assert jnp.array_equal(out4, ref4), "mismatch (partial-block / left=0 case)"

    print("KERNEL_OK")
</pallas_src>

<mosaic_0001>
module attributes {stable_mosaic.version = 11 : i64} {
  func.func @_causal_pad_kernel(%arg0: i32, %arg1: memref<8x16xf32, #tpu.memory_space<vmem>>, %arg2: memref<8x19xf32, #tpu.memory_space<vmem>>) attributes {dimension_semantics = [#tpu.dimension_semantics<parallel>], iteration_bounds = array<i64: 1>, scalar_prefetch = 0 : i64, scratch_operands = 0 : i64, tpu.core_type = #tpu.core_type<tc>, window_params = [{transform_indices = @transform_0, window_bounds = array<i64: 8, 16>}, {transform_indices = @transform_1, window_bounds = array<i64: 8, 19>}]} {
    %cst = arith.constant 0.000000e+00 : f32
    %0 = vector.broadcast %cst : f32 to vector<8x2xf32>
    %c0 = arith.constant 0 : index
    %c0_0 = arith.constant 0 : index
    %1 = vector.load %arg1[%c0, %c0_0] : memref<8x16xf32, #tpu.memory_space<vmem>>, vector<8x16xf32>
    %cst_1 = arith.constant 0.000000e+00 : f32
    %2 = vector.broadcast %cst_1 : f32 to vector<8x1xf32>
    %3 = tpu.concatenate %0, %1, %2 in 1 : vector<8x2xf32>, vector<8x16xf32>, vector<8x1xf32> -> vector<8x19xf32>
    %c0_2 = arith.constant 0 : index
    %c0_3 = arith.constant 0 : index
    %4 = vector.load %arg2[%c0_2, %c0_3] : memref<8x19xf32, #tpu.memory_space<vmem>>, vector<8x19xf32>
    tpu.vector_store %arg2[%c0_2, %c0_3], %3 {strides = array<i32>} : memref<8x19xf32, #tpu.memory_space<vmem>>, vector<8x19xf32>,
    return
  }
  func.func @transform_0(%arg0: i32) -> (i32, i32) {
    %c0_i32 = arith.constant 0 : i32
    %c0_i32_0 = arith.constant 0 : i32
    return %arg0, %c0_i32 : i32, i32
  }
  func.func @transform_1(%arg0: i32) -> (i32, i32) {
    %c0_i32 = arith.constant 0 : i32
    %c0_i32_0 = arith.constant 0 : i32
    return %arg0, %c0_i32 : i32, i32
  }
}

module attributes {stable_mosaic.version = 11 : i64} {
  func.func @_causal_pad_kernel(%arg0: i32, %arg1: memref<8x16xf32, #tpu.memory_space<vmem>>, %arg2: memref<8x19xf32, #tpu.memory_space<vmem>>) attributes {dimension_semantics = [#tpu.dimension_semantics<parallel>], iteration_bounds = array<i64: 1>, scalar_prefetch = 0 : i64, scratch_operands = 0 : i64, tpu.core_type = #tpu.core_type<tc>, window_params = [{transform_indices = @transform_0, window_bounds = array<i64: 8, 16>}, {transform_indices = @transform_1, window_bounds = array<i64: 8, 19>}]} {
    %c0 = arith.constant 0 : index
    %c0_0 = arith.constant 0 : index
    %0 = vector.load %arg1[%c0, %c0_0] : memref<8x16xf32, #tpu.memory_space<vmem>>, vector<8x16xf32>
    %c0_1 = arith.constant 0 : index
    %c2 = arith.constant 2 : index
    %1 = vector.load %arg2[%c0_1, %c2] : memref<8x19xf32, #tpu.memory_space<vmem>>, vector<8x16xf32>
    tpu.vector_store %arg2[%c0_1, %c2], %0 {strides = array<i32>} : memref<8x19xf32, #tpu.memory_space<vmem>>, vector<8x16xf32>,
    %cst = arith.constant 0.000000e+00 : f32
    %2 = vector.broadcast %cst : f32 to vector<8x2xf32>
    %c0_2 = arith.constant 0 : index
    %c0_3 = arith.constant 0 : index
    %3 = vector.load %arg2[%c0_2, %c0_3] : memref<8x19xf32, #tpu.memory_space<vmem>>, vector<8x2xf32>
    tpu.vector_store %arg2[%c0_2, %c0_3], %2 {strides = array<i32>} : memref<8x19xf32, #tpu.memory_space<vmem>>, vector<8x2xf32>,
    %cst_4 = arith.constant 0.000000e+00 : f32
    %4 = vector.broadcast %cst_4 : f32 to vector<8x1xf32>
    %c0_5 = arith.constant 0 : index
    %c18 = arith.constant 18 : index
    %5 = vector.load %arg2[%c0_5, %c18] : memref<8x19xf32, #tpu.memory_space<vmem>>, vector<8x1xf32>
    tpu.vector_store %arg2[%c0_5, %c18], %4 {strides = array<i32>} : memref<8x19xf32, #tpu.memory_space<vmem>>, vector<8x1xf32>,
    return
  }
  func.func @transform_0(%arg0: i32) -> (i32, i32) {
    %c0_i32 = arith.constant 0 : i32
    %c0_i32_0 = arith.constant 0 : i32
    return %arg0, %c0_i32 : i32, i32
  }
  func.func @transform_1(%arg0: i32) -> (i32, i32) {
    %c0_i32 = arith.constant 0 : i32
    %c0_i32_0 = arith.constant 0 : i32
    return %arg0, %c0_i32 : i32, i32
  }
}

</mosaic_0001>

<llo_original>
// kernel: tpu_custom_call.1
$region0: #{tpu_custom_call.1}
  #allocation0 [shape = 'u32[]', space=smem, size = 0x4, offset = 0x4, fixed_abs, tag = 'smem constant byte address 0x4 - core index']
  #allocation1 [shape = 'u32[144,128]{1,0:T(1,128)}', space=vmem, size = 0x12000, scoped, tag = 'internal scratch']
  %s0 = inlined_call_operand.hbm [shape: f32[8,16], index: 0, kind: input, shape index: {}]
  %s1 = inlined_call_operand.hbm [shape: f32[8,19], index: 1, kind: output, shape index: {}]
  %s2 = sld [smem:[#allocation0]]
  $region18: #{tpu_custom_call.1} parent=0
    _
  %s4 = ssub.s32 1, %s2
  %s5 = scalar_select 0, %s4, %s2
  $region1: #{tpu_custom_call.1} parent=0
    #allocation2 [shape = 'u8[4096]{0}', space=vmem, size = 0x1000, scoped, tag = 'input window, operand 0, single buffered']
    #allocation3 [shape = 's32[1]{0}', space=sflag, size = 0x4, scoped, tag = 'scoped memory for tpu_custom_call.1']
    #allocation4 [shape = 's32[1]{0}', space=sflag, size = 0x4, scoped, tag = 'scoped memory for tpu_custom_call.1']
    #allocation5 [shape = 'u8[4096]{0}', space=vmem, size = 0x1000, scoped, tag = 'output window, operand 0, single buffered']
    %6 = vsyncpa [#allocation3], 0
    %7 = vsyncpa [#allocation4], 0
    // Predicated region
    $region2: #{tpu_custom_call.1} parent=1 // pred_check
      _
    $region3: #{tpu_custom_call.1} parent=1 // pred_check_branch
      %9 = sbr.rel (0) target = $region5
    $region4: #{tpu_custom_call.1} parent=1 // pred_region
      %s11 = ssub.s32 128, 128
      %12 = vsyncadd [#allocation3], %s11
      %s14 = sshll.u32 [#allocation2], 4
      %s15 = int_to_ptr.vmem [resolvable:$true] %s14
      %17 = dma.hbm_to_vmem [thread:$0]  %s0, 128, %s15, [#allocation3]
    $region5: #{tpu_custom_call.1} parent=1 // pred_fallthru
      _
    // Predicated region
    $region6: #{tpu_custom_call.1} parent=1 // pred_check
      _
    $region7: #{tpu_custom_call.1} parent=1 // pred_check_branch
      %19 = sbr.rel (0) target = $region9
    $region8: #{tpu_custom_call.1} parent=1 // pred_region
      %20 = dma.done [#allocation3], 128
    $region9: #{tpu_custom_call.1} parent=1 // pred_fallthru
      _
    %v21 = vld [vmem:[#allocation2] sm:$0xff]
    %23 = vrot.lane.b32.xlu0 %v21, 2
    %v24 = vpop.permute.xlu0 %23
    %vm26 = vcmask 15360
    %v27 = vsel %vm26, 0.0, %v24
    %vm28 = vcmask 146432
    %v29 = vsel %vm28, %v27, 0.0
    %vm30 = vcmask 154624
    %31 = vst.msk [vmem:[#allocation5] sm:$0xff] %vm30, %v29
    // Predicated region
    $region10: #{tpu_custom_call.1} parent=1 // pred_check
      _
    $region11: #{tpu_custom_call.1} parent=1 // pred_check_branch
      %33 = sbr.rel (0) target = $region13
    $region12: #{tpu_custom_call.1} parent=1 // pred_region
      %s35 = ssub.s32 128, 128
      %36 = vsyncadd [#allocation4], %s35
      %s38 = sshll.u32 [#allocation5], 4
      %s39 = int_to_ptr.vmem [resolvable:$true] %s38
      %41 = dma.vmem_to_hbm [thread:$0]  %s39, 128, %s1, [#allocation4]
    $region13: #{tpu_custom_call.1} parent=1 // pred_fallthru
      _
    // Predicated region
    $region14: #{tpu_custom_call.1} parent=1 // pred_check
      _
    $region15: #{tpu_custom_call.1} parent=1 // pred_check_branch
      %43 = sbr.rel (0) target = $region17
    $region16: #{tpu_custom_call.1} parent=1 // pred_region
      %44 = dma.done [#allocation4], 128
    $region17: #{tpu_custom_call.1} parent=1 // pred_fallthru
      _
    %45 = vsyncpa [#allocation3], 1
    %46 = vsyncpa [#allocation4], 1

// kernel: tpu_custom_call.1
$region0: #{tpu_custom_call.1}
  #allocation0 [shape = 'u32[]', space=smem, size = 0x4, offset = 0x4, fixed_abs, tag = 'smem constant byte address 0x4 - core index']
  #allocation1 [shape = 'u32[144,128]{1,0:T(1,128)}', space=vmem, size = 0x12000, scoped, tag = 'internal scratch']
  %s0 = inlined_call_operand.hbm [shape: f32[8,16], index: 0, kind: input, shape index: {}]
  %s1 = inlined_call_operand.hbm [shape: f32[8,19], index: 1, kind: output, shape index: {}]
  %s2 = sld [smem:[#allocation0]]
  $region18: #{tpu_custom_call.1} parent=0
    _
  %s4 = ssub.s32 1, %s2
  %s5 = scalar_select 0, %s4, %s2
  $region1: #{tpu_custom_call.1} parent=0
    #allocation2 [shape = 'u8[4096]{0}', space=vmem, size = 0x1000, scoped, tag = 'input window, operand 0, single buffered']
    #allocation3 [shape = 's32[1]{0}', space=sflag, size = 0x4, scoped, tag = 'scoped memory for tpu_custom_call.1']
    #allocation4 [shape = 's32[1]{0}', space=sflag, size = 0x4, scoped, tag = 'scoped memory for tpu_custom_call.1']
    #allocation5 [shape = 'u8[4096]{0}', space=vmem, size = 0x1000, scoped, tag = 'output window, operand 0, single buffered']
    %6 = vsyncpa [#allocation3], 0
    %7 = vsyncpa [#allocation4], 0
    // Predicated region
    $region2: #{tpu_custom_call.1} parent=1 // pred_check
      _
    $region3: #{tpu_custom_call.1} parent=1 // pred_check_branch
      %9 = sbr.rel (0) target = $region5
    $region4: #{tpu_custom_call.1} parent=1 // pred_region
      %s11 = ssub.s32 128, 128
      %12 = vsyncadd [#allocation3], %s11
      %s14 = sshll.u32 [#allocation2], 4
      %s15 = int_to_ptr.vmem [resolvable:$true] %s14
      %17 = dma.hbm_to_vmem [thread:$0]  %s0, 128, %s15, [#allocation3]
    $region5: #{tpu_custom_call.1} parent=1 // pred_fallthru
      _
    // Predicated region
    $region6: #{tpu_custom_call.1} parent=1 // pred_check
      _
    $region7: #{tpu_custom_call.1} parent=1 // pred_check_branch
      %19 = sbr.rel (0) target = $region9
    $region8: #{tpu_custom_call.1} parent=1 // pred_region
      %20 = dma.done [#allocation3], 128
    $region9: #{tpu_custom_call.1} parent=1 // pred_fallthru
      _
    %v21 = vld [vmem:[#allocation2] sm:$0xff]
    %23 = vrot.lane.b32.xlu0 %v21, 2
    %v24 = vpop.permute.xlu0 %23
    %vm26 = vcmask 146448
    %27 = vst.msk [vmem:[#allocation5] sm:$0xff] %vm26, %v24
    %vm28 = vcmask 15360
    %29 = vst.msk [vmem:[#allocation5] sm:$0xff] %vm28, 0.0
    %vm30 = vcmask 154768
    %31 = vst.msk [vmem:[#allocation5] sm:$0xff] %vm30, 0.0
    // Predicated region
    $region10: #{tpu_custom_call.1} parent=1 // pred_check
      _
    $region11: #{tpu_custom_call.1} parent=1 // pred_check_branch
      %33 = sbr.rel (0) target = $region13
    $region12: #{tpu_custom_call.1} parent=1 // pred_region
      %s35 = ssub.s32 128, 128
      %36 = vsyncadd [#allocation4], %s35
      %s38 = sshll.u32 [#allocation5], 4
      %s39 = int_to_ptr.vmem [resolvable:$true] %s38
      %41 = dma.vmem_to_hbm [thread:$0]  %s39, 128, %s1, [#allocation4]
    $region13: #{tpu_custom_call.1} parent=1 // pred_fallthru
      _
    // Predicated region
    $region14: #{tpu_custom_call.1} parent=1 // pred_check
      _
    $region15: #{tpu_custom_call.1} parent=1 // pred_check_branch
      %43 = sbr.rel (0) target = $region17
    $region16: #{tpu_custom_call.1} parent=1 // pred_region
      %44 = dma.done [#allocation4], 128
    $region17: #{tpu_custom_call.1} parent=1 // pred_fallthru
      _
    %45 = vsyncpa [#allocation3], 1
    %46 = vsyncpa [#allocation4], 1

</llo_original>
